<compile_context>
chip_gen: v7x
topology: tpu7x:2x2x1
jax: 0.10.0
libtpu: 0.0.40
codegen_flags: <defaults>
</compile_context>

<pallas_src>
import math

import jax
import jax.numpy as jnp
from jax.experimental import pallas as pl
from jax.experimental.pallas import tpu as pltpu

# TODO(synk): MASK_TOKEN / MASK_VALUE are undefined globals in the original
# module; we follow the common convention (mask == 0 means "masked out",
# filled with a large negative value before the softmax).
MASK_TOKEN = 0
MASK_VALUE = -1e9


def attention_head_kernel(q_ref, k_ref, v_ref, mask_ref,
                          wq_ref, bq_ref, wk_ref, bk_ref, wv_ref, bv_ref,
                          out_ref):
    """One grid step = one batch element, fully fused in VMEM.

    q_ref / k_ref / v_ref : (1, S, E) float32
    mask_ref              : (1, Sq, Sk) int32
    w*_ref                : (E, D) pre-transposed projection weights
    b*_ref                : (1, D) biases
    out_ref               : (1, Sq, Dv)
    """
    q = q_ref[0]          # (Sq, E)
    k = k_ref[0]          # (Sk, E)
    v = v_ref[0]          # (Sk, E)

    # Linear projections on the MXU (weights already transposed host-side,
    # so no in-kernel transpose is needed).
    hq = jnp.dot(q, wq_ref[...], preferred_element_type=jnp.float32) + bq_ref[...]
    hk = jnp.dot(k, wk_ref[...], preferred_element_type=jnp.float32) + bk_ref[...]
    hv = jnp.dot(v, wv_ref[...], preferred_element_type=jnp.float32) + bv_ref[...]

    # energy = hq @ hk^T via dot_general (contract last dims; avoids an
    # explicit XLU transpose of hk).
    energy = jax.lax.dot_general(
        hq, hk, (((1,), (1,)), ((), ())),
        preferred_element_type=jnp.float32)                       # (Sq, Sk)

    # masked_fill(energy, mask == MASK_TOKEN, MASK_VALUE), then scale.
    energy = jnp.where(mask_ref[0] == MASK_TOKEN, MASK_VALUE, energy)
    scaled = energy * (1.0 / math.sqrt(hq.shape[-1]))

    # Numerically stable softmax along the key axis.
    m = jnp.max(scaled, axis=-1, keepdims=True)
    p = jnp.exp(scaled - m)
    att = p / jnp.sum(p, axis=-1, keepdims=True)                  # (Sq, Sk)

    out_ref[0] = jnp.dot(att, hv,
                         preferred_element_type=jnp.float32).astype(out_ref.dtype)


def attention_head_forward(query, key, value, mask, params):
    """query/key/value: (B, S, E) float32; mask: (B, Sq, Sk) or None.

    params: dict with nn.Linear-layout weights 'wq','wk','wv' of shape (D, E)
    and biases 'bq','bk','bv' of shape (D,).
    Returns (B, Sq, Dv) float32.
    """
    wq, bq = params["wq"], params["bq"]
    wk, bk = params["wk"], params["bk"]
    wv, bv = params["wv"], params["bv"]

    b, sq, e = query.shape
    _, sk, _ = key.shape
    qd, kd, vd = wq.shape[0], wk.shape[0], wv.shape[0]

    if mask is None:
        # No masking: every position compares unequal to MASK_TOKEN.
        mask = jnp.full((b, sq, sk), MASK_TOKEN + 1, dtype=jnp.int32)
    mask = jnp.broadcast_to(mask.astype(jnp.int32), (b, sq, sk))

    # Pre-transpose weights (E, D) and lift biases to 2-D — pure host-side
    # layout plumbing so the kernel's matmuls are MXU-direct.
    wq_t, wk_t, wv_t = wq.T, wk.T, wv.T
    bq2, bk2, bv2 = bq.reshape(1, qd), bk.reshape(1, kd), bv.reshape(1, vd)

    out = pl.pallas_call(
        attention_head_kernel,
        out_shape=jax.ShapeDtypeStruct((b, sq, vd), query.dtype),
        grid_spec=pl.GridSpec(
            grid=(b,),
            in_specs=[
                pl.BlockSpec((1, sq, e), lambda i: (i, 0, 0)),     # query
                pl.BlockSpec((1, sk, e), lambda i: (i, 0, 0)),     # key
                pl.BlockSpec((1, sk, e), lambda i: (i, 0, 0)),     # value
                pl.BlockSpec((1, sq, sk), lambda i: (i, 0, 0)),    # mask
                pl.BlockSpec((e, qd), lambda i: (0, 0)),           # Wq^T
                pl.BlockSpec((1, qd), lambda i: (0, 0)),           # bq
                pl.BlockSpec((e, kd), lambda i: (0, 0)),           # Wk^T
                pl.BlockSpec((1, kd), lambda i: (0, 0)),           # bk
                pl.BlockSpec((e, vd), lambda i: (0, 0)),           # Wv^T
                pl.BlockSpec((1, vd), lambda i: (0, 0)),           # bv
            ],
            out_specs=pl.BlockSpec((1, sq, vd), lambda i: (i, 0, 0)),
        ),
        compiler_params=pltpu.CompilerParams(
            dimension_semantics=("parallel",),
        ),
    )(query, key, value, mask, wq_t, bq2, wk_t, bk2, wv_t, bv2)

    return out


if __name__ == "__main__":
    # Small shapes consistent with the module.
    batch, seq = 2, 8
    emb_len = 32
    q_len = k_len = 16        # query_len must equal key_len for QK^T
    v_len = 16

    root = jax.random.PRNGKey(0)
    keys = jax.random.split(root, 10)

    # nn.Linear default init: U(-1/sqrt(fan_in), 1/sqrt(fan_in)).
    bound = 1.0 / math.sqrt(emb_len)
    params = {
        "wq": jax.random.uniform(keys[0], (q_len, emb_len), jnp.float32, -bound, bound),
        "bq": jax.random.uniform(keys[1], (q_len,), jnp.float32, -bound, bound),
        "wk": jax.random.uniform(keys[2], (k_len, emb_len), jnp.float32, -bound, bound),
        "bk": jax.random.uniform(keys[3], (k_len,), jnp.float32, -bound, bound),
        "wv": jax.random.uniform(keys[4], (v_len, emb_len), jnp.float32, -bound, bound),
        "bv": jax.random.uniform(keys[5], (v_len,), jnp.float32, -bound, bound),
    }

    query = jax.random.normal(keys[6], (batch, seq, emb_len), dtype=jnp.float32)
    key_in = jax.random.normal(keys[7], (batch, seq, emb_len), dtype=jnp.float32)
    value_in = jax.random.normal(keys[8], (batch, seq, emb_len), dtype=jnp.float32)

    # Causal mask: positions where mask == MASK_TOKEN (=0) are masked out.
    causal = jnp.tril(jnp.ones((seq, seq), dtype=jnp.int32))
    mask = jnp.broadcast_to(causal, (batch, seq, seq))

    out = attention_head_forward(query, key_in, value_in, mask, params)
    out = jax.block_until_ready(out)

    # Plain-JAX reference mirroring the PyTorch forward exactly.
    def ref_forward(q, k, v, m):
        hq = q @ params["wq"].T + params["bq"]
        hk = k @ params["wk"].T + params["bk"]
        hv = v @ params["wv"].T + params["bv"]
        energy = jnp.einsum("bqd,bkd->bqk", hq, hk)
        energy = jnp.where(m == MASK_TOKEN, MASK_VALUE, energy)
        att = jax.nn.softmax(energy / math.sqrt(hq.shape[-1]), axis=-1)
        return jnp.einsum("bqk,bkd->bqd", att, hv)

    ref = ref_forward(query, key_in, value_in, mask)

    assert out.shape == (batch, seq, v_len)
    assert out.dtype == jnp.float32
    assert jnp.allclose(out, ref, atol=1e-5, rtol=1e-5), float(jnp.max(jnp.abs(out - ref)))

    print("KERNEL_OK")
</pallas_src>

<mosaic_0001>
module attributes {stable_mosaic.version = 11 : i64} {
  func.func @attention_head_kernel(%arg0: i32, %arg1: memref<1x8x32xf32, #tpu.memory_space<vmem>>, %arg2: memref<1x8x32xf32, #tpu.memory_space<vmem>>, %arg3: memref<1x8x32xf32, #tpu.memory_space<vmem>>, %arg4: memref<1x8x8xi32, #tpu.memory_space<vmem>>, %arg5: memref<32x16xf32, #tpu.memory_space<vmem>>, %arg6: memref<1x16xf32, #tpu.memory_space<vmem>>, %arg7: memref<32x16xf32, #tpu.memory_space<vmem>>, %arg8: memref<1x16xf32, #tpu.memory_space<vmem>>, %arg9: memref<32x16xf32, #tpu.memory_space<vmem>>, %arg10: memref<1x16xf32, #tpu.memory_space<vmem>>, %arg11: memref<1x8x16xf32, #tpu.memory_space<vmem>>) attributes {dimension_semantics = [#tpu.dimension_semantics<parallel>], iteration_bounds = array<i64: 2>, scalar_prefetch = 0 : i64, scratch_operands = 0 : i64, tpu.core_type = #tpu.core_type<tc>, window_params = [{transform_indices = @transform_0, window_bounds = array<i64: 1, 8, 32>}, {transform_indices = @transform_1, window_bounds = array<i64: 1, 8, 32>}, {transform_indices = @transform_2, window_bounds = array<i64: 1, 8, 32>}, {transform_indices = @transform_3, window_bounds = array<i64: 1, 8, 8>}, {pipeline_mode = #tpu.pipeline_mode<synchronous>, transform_indices = @transform_4, window_bounds = array<i64: 32, 16>}, {pipeline_mode = #tpu.pipeline_mode<synchronous>, transform_indices = @transform_5, window_bounds = array<i64: 1, 16>}, {pipeline_mode = #tpu.pipeline_mode<synchronous>, transform_indices = @transform_6, window_bounds = array<i64: 32, 16>}, {pipeline_mode = #tpu.pipeline_mode<synchronous>, transform_indices = @transform_7, window_bounds = array<i64: 1, 16>}, {pipeline_mode = #tpu.pipeline_mode<synchronous>, transform_indices = @transform_8, window_bounds = array<i64: 32, 16>}, {pipeline_mode = #tpu.pipeline_mode<synchronous>, transform_indices = @transform_9, window_bounds = array<i64: 1, 16>}, {transform_indices = @transform_10, window_bounds = array<i64: 1, 8, 16>}]} {
    %c0 = arith.constant 0 : index
    %c0_0 = arith.constant 0 : index
    %c0_1 = arith.constant 0 : index
    %0 = vector.load %arg1[%c0, %c0_0, %c0_1] : memref<1x8x32xf32, #tpu.memory_space<vmem>>, vector<1x8x32xf32>
    %1 = vector.shape_cast %0 : vector<1x8x32xf32> to vector<8x32xf32>
    %c0_2 = arith.constant 0 : index
    %c0_3 = arith.constant 0 : index
    %c0_4 = arith.constant 0 : index
    %2 = vector.load %arg2[%c0_2, %c0_3, %c0_4] : memref<1x8x32xf32, #tpu.memory_space<vmem>>, vector<1x8x32xf32>
    %3 = vector.shape_cast %2 : vector<1x8x32xf32> to vector<8x32xf32>
    %c0_5 = arith.constant 0 : index
    %c0_6 = arith.constant 0 : index
    %c0_7 = arith.constant 0 : index
    %4 = vector.load %arg3[%c0_5, %c0_6, %c0_7] : memref<1x8x32xf32, #tpu.memory_space<vmem>>, vector<1x8x32xf32>
    %5 = vector.shape_cast %4 : vector<1x8x32xf32> to vector<8x32xf32>
    %c0_8 = arith.constant 0 : index
    %c0_9 = arith.constant 0 : index
    %6 = vector.load %arg5[%c0_8, %c0_9] : memref<32x16xf32, #tpu.memory_space<vmem>>, vector<32x16xf32>
    %cst = arith.constant dense<0.000000e+00> : vector<8x16xf32>
    %7 = tpu.matmul %1, %6, %cst {dimension_numbers = #tpu.dot_dimension_numbers<[1], [0], [0], [1], [0, 0, 1, 1], [], []>} : vector<8x32xf32>, vector<32x16xf32>, vector<8x16xf32> -> vector<8x16xf32>
    %c0_10 = arith.constant 0 : index
    %c0_11 = arith.constant 0 : index
    %8 = vector.load %arg6[%c0_10, %c0_11] : memref<1x16xf32, #tpu.memory_space<vmem>>, vector<1x16xf32>
    %9 = vector.broadcast %8 : vector<1x16xf32> to vector<8x16xf32>
    %10 = arith.addf %7, %9 : vector<8x16xf32>
    %c0_12 = arith.constant 0 : index
    %c0_13 = arith.constant 0 : index
    %11 = vector.load %arg7[%c0_12, %c0_13] : memref<32x16xf32, #tpu.memory_space<vmem>>, vector<32x16xf32>
    %cst_14 = arith.constant dense<0.000000e+00> : vector<8x16xf32>
    %12 = tpu.matmul %3, %11, %cst_14 {dimension_numbers = #tpu.dot_dimension_numbers<[1], [0], [0], [1], [0, 0, 1, 1], [], []>} : vector<8x32xf32>, vector<32x16xf32>, vector<8x16xf32> -> vector<8x16xf32>
    %c0_15 = arith.constant 0 : index
    %c0_16 = arith.constant 0 : index
    %13 = vector.load %arg8[%c0_15, %c0_16] : memref<1x16xf32, #tpu.memory_space<vmem>>, vector<1x16xf32>
    %14 = vector.broadcast %13 : vector<1x16xf32> to vector<8x16xf32>
    %15 = arith.addf %12, %14 : vector<8x16xf32>
    %c0_17 = arith.constant 0 : index
    %c0_18 = arith.constant 0 : index
    %16 = vector.load %arg9[%c0_17, %c0_18] : memref<32x16xf32, #tpu.memory_space<vmem>>, vector<32x16xf32>
    %cst_19 = arith.constant dense<0.000000e+00> : vector<8x16xf32>
    %17 = tpu.matmul %5, %16, %cst_19 {dimension_numbers = #tpu.dot_dimension_numbers<[1], [0], [0], [1], [0, 0, 1, 1], [], []>} : vector<8x32xf32>, vector<32x16xf32>, vector<8x16xf32> -> vector<8x16xf32>
    %c0_20 = arith.constant 0 : index
    %c0_21 = arith.constant 0 : index
    %18 = vector.load %arg10[%c0_20, %c0_21] : memref<1x16xf32, #tpu.memory_space<vmem>>, vector<1x16xf32>
    %19 = vector.broadcast %18 : vector<1x16xf32> to vector<8x16xf32>
    %20 = arith.addf %17, %19 : vector<8x16xf32>
    %cst_22 = arith.constant dense<0.000000e+00> : vector<8x8xf32>
    %21 = tpu.matmul %10, %15, %cst_22 {dimension_numbers = #tpu.dot_dimension_numbers<[1], [1], [0], [0], [0, 0, 1, 0], [], []>} : vector<8x16xf32>, vector<8x16xf32>, vector<8x8xf32> -> vector<8x8xf32>
    %c0_23 = arith.constant 0 : index
    %c0_24 = arith.constant 0 : index
    %c0_25 = arith.constant 0 : index
    %22 = vector.load %arg4[%c0_23, %c0_24, %c0_25] : memref<1x8x8xi32, #tpu.memory_space<vmem>>, vector<1x8x8xi32>
    %23 = vector.shape_cast %22 : vector<1x8x8xi32> to vector<8x8xi32>
    %c0_i32 = arith.constant 0 : i32
    %24 = vector.broadcast %c0_i32 : i32 to vector<8x8xi32>
    %25 = arith.cmpi eq, %23, %24 : vector<8x8xi32>
    %cst_26 = arith.constant -1.000000e+09 : f32
    %26 = vector.broadcast %cst_26 : f32 to vector<8x8xf32>
    %27 = arith.select %25, %26, %21 : vector<8x8xi1>, vector<8x8xf32>
    %cst_27 = arith.constant 2.500000e-01 : f32
    %28 = vector.broadcast %cst_27 : f32 to vector<8x8xf32>
    %29 = arith.mulf %27, %28 : vector<8x8xf32>
    %cst_28 = arith.constant dense<0xFF800000> : vector<8xf32>
    %30 = vector.multi_reduction <maximumf>, %29, %cst_28 [1] : vector<8x8xf32> to vector<8xf32>
    %31 = vector.shape_cast %30 : vector<8xf32> to vector<8x1xf32>
    %32 = vector.broadcast %31 : vector<8x1xf32> to vector<8x8xf32>
    %33 = arith.subf %29, %32 : vector<8x8xf32>
    %34 = math.exp %33 : vector<8x8xf32>
    %cst_29 = arith.constant dense<0.000000e+00> : vector<8xf32>
    %35 = vector.multi_reduction <add>, %34, %cst_29 [1] : vector<8x8xf32> to vector<8xf32>
    %36 = vector.shape_cast %35 : vector<8xf32> to vector<8x1xf32>
    %37 = vector.broadcast %36 : vector<8x1xf32> to vector<8x8xf32>
    %38 = arith.divf %34, %37 : vector<8x8xf32>
    %cst_30 = arith.constant dense<0.000000e+00> : vector<8x16xf32>
    %39 = tpu.matmul %38, %20, %cst_30 {dimension_numbers = #tpu.dot_dimension_numbers<[1], [0], [0], [1], [0, 0, 1, 1], [], []>} : vector<8x8xf32>, vector<8x16xf32>, vector<8x16xf32> -> vector<8x16xf32>
    %c0_31 = arith.constant 0 : index
    %c0_32 = arith.constant 0 : index
    %c0_33 = arith.constant 0 : index
    %40 = vector.load %arg11[%c0_31, %c0_32, %c0_33] : memref<1x8x16xf32, #tpu.memory_space<vmem>>, vector<1x8x16xf32>
    %41 = vector.shape_cast %40 : vector<1x8x16xf32> to vector<8x16xf32>
    %42 = vector.shape_cast %39 : vector<8x16xf32> to vector<1x8x16xf32>
    tpu.vector_store %arg11[%c0_31, %c0_32, %c0_33], %42 {strides = array<i32>} : memref<1x8x16xf32, #tpu.memory_space<vmem>>, vector<1x8x16xf32>,
    return
  }
  func.func @transform_0(%arg0: i32) -> (i32, i32, i32) {
    %c0_i32 = arith.constant 0 : i32
    %c0_i32_0 = arith.constant 0 : i32
    %c0_i32_1 = arith.constant 0 : i32
    return %arg0, %c0_i32, %c0_i32_0 : i32, i32, i32
  }
  func.func @transform_1(%arg0: i32) -> (i32, i32, i32) {
    %c0_i32 = arith.constant 0 : i32
    %c0_i32_0 = arith.constant 0 : i32
    %c0_i32_1 = arith.constant 0 : i32
    return %arg0, %c0_i32, %c0_i32_0 : i32, i32, i32
  }
  func.func @transform_2(%arg0: i32) -> (i32, i32, i32) {
    %c0_i32 = arith.constant 0 : i32
    %c0_i32_0 = arith.constant 0 : i32
    %c0_i32_1 = arith.constant 0 : i32
    return %arg0, %c0_i32, %c0_i32_0 : i32, i32, i32
  }
  func.func @transform_3(%arg0: i32) -> (i32, i32, i32) {
    %c0_i32 = arith.constant 0 : i32
    %c0_i32_0 = arith.constant 0 : i32
    %c0_i32_1 = arith.constant 0 : i32
    return %arg0, %c0_i32, %c0_i32_0 : i32, i32, i32
  }
  func.func @transform_4(%arg0: i32) -> (i32, i32) {
    %c0_i32 = arith.constant 0 : i32
    %c0_i32_0 = arith.constant 0 : i32
    %c0_i32_1 = arith.constant 0 : i32
    return %c0_i32, %c0_i32_0 : i32, i32
  }
  func.func @transform_5(%arg0: i32) -> (i32, i32) {
    %c0_i32 = arith.constant 0 : i32
    %c0_i32_0 = arith.constant 0 : i32
    %c0_i32_1 = arith.constant 0 : i32
    return %c0_i32, %c0_i32_0 : i32, i32
  }
  func.func @transform_6(%arg0: i32) -> (i32, i32) {
    %c0_i32 = arith.constant 0 : i32
    %c0_i32_0 = arith.constant 0 : i32
    %c0_i32_1 = arith.constant 0 : i32
    return %c0_i32, %c0_i32_0 : i32, i32
  }
  func.func @transform_7(%arg0: i32) -> (i32, i32) {
    %c0_i32 = arith.constant 0 : i32
    %c0_i32_0 = arith.constant 0 : i32
    %c0_i32_1 = arith.constant 0 : i32
    return %c0_i32, %c0_i32_0 : i32, i32
  }
  func.func @transform_8(%arg0: i32) -> (i32, i32) {
    %c0_i32 = arith.constant 0 : i32
    %c0_i32_0 = arith.constant 0 : i32
    %c0_i32_1 = arith.constant 0 : i32
    return %c0_i32, %c0_i32_0 : i32, i32
  }
  func.func @transform_9(%arg0: i32) -> (i32, i32) {
    %c0_i32 = arith.constant 0 : i32
    %c0_i32_0 = arith.constant 0 : i32
    %c0_i32_1 = arith.constant 0 : i32
    return %c0_i32, %c0_i32_0 : i32, i32
  }
  func.func @transform_10(%arg0: i32) -> (i32, i32, i32) {
    %c0_i32 = arith.constant 0 : i32
    %c0_i32_0 = arith.constant 0 : i32
    %c0_i32_1 = arith.constant 0 : i32
    return %arg0, %c0_i32, %c0_i32_0 : i32, i32, i32
  }
}

</mosaic_0001>

<llo_original>
// kernel: tpu_custom_call.1
$region0: #{tpu_custom_call.1}
  #allocation0 [shape = 'u32[]', space=smem, size = 0x4, offset = 0x4, fixed_abs, tag = 'smem constant byte address 0x4 - core index']
  #allocation1 [shape = 'u32[144,128]{1,0:T(1,128)}', space=vmem, size = 0x12000, scoped, tag = 'internal scratch']
  %s0 = inlined_call_operand.vmem [shape: f32[2,8,32], index: 0, kind: input, shape index: {}]
  %s1 = inlined_call_operand.vmem [shape: f32[2,8,32], index: 1, kind: input, shape index: {}]
  %s2 = inlined_call_operand.vmem [shape: f32[2,8,32], index: 2, kind: input, shape index: {}]
  %s3 = inlined_call_operand.vmem [shape: s32[2,8,8], index: 3, kind: input, shape index: {}]
  %s4 = inlined_call_operand.vmem [shape: f32[32,16], index: 4, kind: input, shape index: {}]
  %s5 = inlined_call_operand.vmem [shape: f32[1,16], index: 5, kind: input, shape index: {}]
  %s6 = inlined_call_operand.vmem [shape: f32[32,16], index: 6, kind: input, shape index: {}]
  %s7 = inlined_call_operand.vmem [shape: f32[1,16], index: 7, kind: input, shape index: {}]
  %s8 = inlined_call_operand.vmem [shape: f32[32,16], index: 8, kind: input, shape index: {}]
  %s9 = inlined_call_operand.vmem [shape: f32[1,16], index: 9, kind: input, shape index: {}]
  %s10 = inlined_call_operand.hbm [shape: f32[2,8,16], index: 10, kind: output, shape index: {}]
  %s11 = sld [smem:[#allocation0]]
  $region73: #{tpu_custom_call.1} parent=0
    _
  %s13 = ssub.s32 1, %s11
  %s14 = scalar_select 0, %s13, %s11
  $region1: #{tpu_custom_call.1} parent=0
    #allocation2 [shape = 'u8[8192]{0}', space=vmem, size = 0x2000, scoped, tag = 'output window, operand 0']
    #allocation3 [shape = 's32[2]{0}', space=sflag, size = 0x8, scoped, tag = 'scoped memory for tpu_custom_call.1']
    %15 = vsyncpa [#allocation3], 0
    %s16 = scalar_lea.sflag [#allocation3], 1
    %17 = vsyncpa %s16, 0
    loop: start=0, step=1, limit=4
    $region2: #{tpu_custom_call.1} parent=1 // loop_pre_header
      _
    $region3: #{tpu_custom_call.1} parent=1 // loop_header
      %s19 = sphi 0, %s23
      %p20 = scmp.ge.s32.totalorder %s19, 4
      %s29 = sphi 0, %s31
      %s32 = sphi 0, %s29
      %s33 = sphi 0, %s32
      %s49 = sphi 0, %s33
      %s55 = sphi 0, %s57
      %s58 = sphi 0, %s55
      %s59 = sphi 0, %s58
      %s75 = sphi 0, %s59
      %s81 = sphi 0, %s83
      %s84 = sphi 0, %s81
      %s85 = sphi 0, %s84
      %s101 = sphi 0, %s85
      %s107 = sphi 0, %s109
      %s110 = sphi 0, %s107
      %s111 = sphi 0, %s110
      %s127 = sphi 0, %s111
      %s131 = sphi 0, %s131
      %s133 = sphi 0, %s131
      %s134 = sphi 0, %s133
      %s148 = sphi 0, %s134
      %s152 = sphi 0, %s152
      %s154 = sphi 0, %s152
      %s155 = sphi 0, %s154
      %s169 = sphi 0, %s155
      %s173 = sphi 0, %s173
      %s175 = sphi 0, %s173
      %s176 = sphi 0, %s175
      %s190 = sphi 0, %s176
      %s194 = sphi 0, %s194
      %s196 = sphi 0, %s194
      %s197 = sphi 0, %s196
      %s211 = sphi 0, %s197
      %s215 = sphi 0, %s215
      %s217 = sphi 0, %s215
      %s218 = sphi 0, %s217
      %s232 = sphi 0, %s218
      %s236 = sphi 0, %s236
      %s238 = sphi 0, %s236
      %s239 = sphi 0, %s238
      %s253 = sphi 0, %s239
      %s259 = sphi 0, %s261
      %s262 = sphi 0, %s259
      %s263 = sphi 0, %s262
      %s279 = sphi 0, %s263
    $region4: #{tpu_custom_call.1} parent=1 // loop_header_branch
      %22 = sbr.rel (%p20) target = $region8
    $region5: #{tpu_custom_call.1} parent=1 // loop_body
      %s24 = ssub.s32 %s19, 1
      %s25 = ssub.s32 %s19, 2
      %s26 = sadd.s32 %s19, 1
      %s27 = ssub.s32 %s19, %s26
      %p28 = scmp.eq.s32.totalorder %s27, 0
      %s30 = sadd.s32 %s29, 1
      %s31 = scalar_select %p28, %s29, %s30
      %p34 = pneg %p28
      %p35 = scmp.eq.s32.totalorder %s19, 1
      %p36 = por %p34, %p35
      %p37 = scmp.ne.s32.totalorder %s29, %s32
      %p38 = scmp.eq.s32.totalorder %s19, 0
      %p39 = por %p37, %p38
      %p40 = scmp.ne.s32.totalorder %s29, %s32
      %p41 = scmp.eq.s32.totalorder %s24, 1
      %p42 = por %p40, %p41
      %p43 = scmp.ne.s32.totalorder %s32, %s33
      %p44 = scmp.eq.s32.totalorder %s24, 0
      %p45 = por %p43, %p44
      %p46 = scmp.ne.s32.totalorder %s32, %s33
      %p47 = scmp.eq.s32.totalorder %s25, 1
      %p48 = por %p46, %p47
      %p50 = scmp.ne.s32.totalorder %s33, %s49
      %p51 = scmp.eq.s32.totalorder %s25, 0
      %p52 = por %p50, %p51
      %s53 = ssub.s32 %s19, %s26
      %p54 = scmp.eq.s32.totalorder %s53, 0
      %s56 = sadd.s32 %s55, 1
      %s57 = scalar_select %p54, %s55, %s56
      %p60 = pneg %p54
      %p61 = scmp.eq.s32.totalorder %s19, 1
      %p62 = por %p60, %p61
      %p63 = scmp.ne.s32.totalorder %s55, %s58
      %p64 = scmp.eq.s32.totalorder %s19, 0
      %p65 = por %p63, %p64
      %p66 = scmp.ne.s32.totalorder %s55, %s58
      %p67 = scmp.eq.s32.totalorder %s24, 1
      %p68 = por %p66, %p67
      %p69 = scmp.ne.s32.totalorder %s58, %s59
      %p70 = scmp.eq.s32.totalorder %s24, 0
      %p71 = por %p69, %p70
      %p72 = scmp.ne.s32.totalorder %s58, %s59
      %p73 = scmp.eq.s32.totalorder %s25, 1
      %p74 = por %p72, %p73
      %p76 = scmp.ne.s32.totalorder %s59, %s75
      %p77 = scmp.eq.s32.totalorder %s25, 0
      %p78 = por %p76, %p77
      %s79 = ssub.s32 %s19, %s26
      %p80 = scmp.eq.s32.totalorder %s79, 0
      %s82 = sadd.s32 %s81, 1
      %s83 = scalar_select %p80, %s81, %s82
      %p86 = pneg %p80
      %p87 = scmp.eq.s32.totalorder %s19, 1
      %p88 = por %p86, %p87
      %p89 = scmp.ne.s32.totalorder %s81, %s84
      %p90 = scmp.eq.s32.totalorder %s19, 0
      %p91 = por %p89, %p90
      %p92 = scmp.ne.s32.totalorder %s81, %s84
      %p93 = scmp.eq.s32.totalorder %s24, 1
      %p94 = por %p92, %p93
      %p95 = scmp.ne.s32.totalorder %s84, %s85
      %p96 = scmp.eq.s32.totalorder %s24, 0
      %p97 = por %p95, %p96
      %p98 = scmp.ne.s32.totalorder %s84, %s85
      %p99 = scmp.eq.s32.totalorder %s25, 1
      %p100 = por %p98, %p99
      %p102 = scmp.ne.s32.totalorder %s85, %s101
      %p103 = scmp.eq.s32.totalorder %s25, 0
      %p104 = por %p102, %p103
      %s105 = ssub.s32 %s19, %s26
      %p106 = scmp.eq.s32.totalorder %s105, 0
      %s108 = sadd.s32 %s107, 1
      %s109 = scalar_select %p106, %s107, %s108
      %p112 = pneg %p106
      %p113 = scmp.eq.s32.totalorder %s19, 1
      %p114 = por %p112, %p113
      %p115 = scmp.ne.s32.totalorder %s107, %s110
      %p116 = scmp.eq.s32.totalorder %s19, 0
      %p117 = por %p115, %p116
      %p118 = scmp.ne.s32.totalorder %s107, %s110
      %p119 = scmp.eq.s32.totalorder %s24, 1
      %p120 = por %p118, %p119
      %p121 = scmp.ne.s32.totalorder %s110, %s111
      %p122 = scmp.eq.s32.totalorder %s24, 0
      %p123 = por %p121, %p122
      %p124 = scmp.ne.s32.totalorder %s110, %s111
      %p125 = scmp.eq.s32.totalorder %s25, 1
      %p126 = por %p124, %p125
      %p128 = scmp.ne.s32.totalorder %s111, %s127
      %p129 = scmp.eq.s32.totalorder %s25, 0
      %p130 = por %p128, %p129
      %s132 = sadd.s32 %s131, 1
      %p135 = scmp.eq.s32.totalorder %s19, 1
      %p136 = scmp.ne.s32.totalorder %s131, %s133
      %p137 = scmp.eq.s32.totalorder %s19, 0
      %p138 = por %p136, %p137
      %p139 = scmp.ne.s32.totalorder %s131, %s133
      %p140 = scmp.eq.s32.totalorder %s24, 1
      %p141 = por %p139, %p140
      %p142 = scmp.ne.s32.totalorder %s133, %s134
      %p143 = scmp.eq.s32.totalorder %s24, 0
      %p144 = por %p142, %p143
      %p145 = scmp.ne.s32.totalorder %s133, %s134
      %p146 = scmp.eq.s32.totalorder %s25, 1
      %p147 = por %p145, %p146
      %p149 = scmp.ne.s32.totalorder %s134, %s148
      %p150 = scmp.eq.s32.totalorder %s25, 0
      %p151 = por %p149, %p150
      %s153 = sadd.s32 %s152, 1
      %p156 = scmp.eq.s32.totalorder %s19, 1
      %p157 = scmp.ne.s32.totalorder %s152, %s154
      %p158 = scmp.eq.s32.totalorder %s19, 0
      %p159 = por %p157, %p158
      %p160 = scmp.ne.s32.totalorder %s152, %s154
      %p161 = scmp.eq.s32.totalorder %s24, 1
      %p162 = por %p160, %p161
      %p163 = scmp.ne.s32.totalorder %s154, %s155
      %p164 = scmp.eq.s32.totalorder %s24, 0
      %p165 = por %p163, %p164
      %p166 = scmp.ne.s32.totalorder %s154, %s155
      %p167 = scmp.eq.s32.totalorder %s25, 1
      %p168 = por %p166, %p167
      %p170 = scmp.ne.s32.totalorder %s155, %s169
      %p171 = scmp.eq.s32.totalorder %s25, 0
      %p172 = por %p170, %p171
      %s174 = sadd.s32 %s173, 1
      %p177 = scmp.eq.s32.totalorder %s19, 1
      %p178 = scmp.ne.s32.totalorder %s173, %s175
      %p179 = scmp.eq.s32.totalorder %s19, 0
      %p180 = por %p178, %p179
      %p181 = scmp.ne.s32.totalorder %s173, %s175
      %p182 = scmp.eq.s32.totalorder %s24, 1
      %p183 = por %p181, %p182
      %p184 = scmp.ne.s32.totalorder %s175, %s176
      %p185 = scmp.eq.s32.totalorder %s24, 0
      %p186 = por %p184, %p185
      %p187 = scmp.ne.s32.totalorder %s175, %s176
      %p188 = scmp.eq.s32.totalorder %s25, 1
      %p189 = por %p187, %p188
      %p191 = scmp.ne.s32.totalorder %s176, %s190
      %p192 = scmp.eq.s32.totalorder %s25, 0
      %p193 = por %p191, %p192
      %s195 = sadd.s32 %s194, 1
      %p198 = scmp.eq.s32.totalorder %s19, 1
      %p199 = scmp.ne.s32.totalorder %s194, %s196
      %p200 = scmp.eq.s32.totalorder %s19, 0
      %p201 = por %p199, %p200
      %p202 = scmp.ne.s32.totalorder %s194, %s196
      %p203 = scmp.eq.s32.totalorder %s24, 1
      %p204 = por %p202, %p203
      %p205 = scmp.ne.s32.totalorder %s196, %s197
      %p206 = scmp.eq.s32.totalorder %s24, 0
      %p207 = por %p205, %p206
      %p208 = scmp.ne.s32.totalorder %s196, %s197
      %p209 = scmp.eq.s32.totalorder %s25, 1
      %p210 = por %p208, %p209
      %p212 = scmp.ne.s32.totalorder %s197, %s211
      %p213 = scmp.eq.s32.totalorder %s25, 0
      %p214 = por %p212, %p213
      %s216 = sadd.s32 %s215, 1
      %p219 = scmp.eq.s32.totalorder %s19, 1
      %p220 = scmp.ne.s32.totalorder %s215, %s217
      %p221 = scmp.eq.s32.totalorder %s19, 0
      %p222 = por %p220, %p221
      %p223 = scmp.ne.s32.totalorder %s215, %s217
      %p224 = scmp.eq.s32.totalorder %s24, 1
      %p225 = por %p223, %p224
      %p226 = scmp.ne.s32.totalorder %s217, %s218
      %p227 = scmp.eq.s32.totalorder %s24, 0
      %p228 = por %p226, %p227
      %p229 = scmp.ne.s32.totalorder %s217, %s218
      %p230 = scmp.eq.s32.totalorder %s25, 1
      %p231 = por %p229, %p230
      %p233 = scmp.ne.s32.totalorder %s218, %s232
      %p234 = scmp.eq.s32.totalorder %s25, 0
      %p235 = por %p233, %p234
      %s237 = sadd.s32 %s236, 1
      %p240 = scmp.eq.s32.totalorder %s19, 1
      %p241 = scmp.ne.s32.totalorder %s236, %s238
      %p242 = scmp.eq.s32.totalorder %s19, 0
      %p243 = por %p241, %p242
      %p244 = scmp.ne.s32.totalorder %s236, %s238
      %p245 = scmp.eq.s32.totalorder %s24, 1
      %p246 = por %p244, %p245
      %p247 = scmp.ne.s32.totalorder %s238, %s239
      %p248 = scmp.eq.s32.totalorder %s24, 0
      %p249 = por %p247, %p248
      %p250 = scmp.ne.s32.totalorder %s238, %s239
      %p251 = scmp.eq.s32.totalorder %s25, 1
      %p252 = por %p250, %p251
      %p254 = scmp.ne.s32.totalorder %s239, %s253
      %p255 = scmp.eq.s32.totalorder %s25, 0
      %p256 = por %p254, %p255
      %s257 = ssub.s32 %s19, %s26
      %p258 = scmp.eq.s32.totalorder %s257, 0
      %s260 = sadd.s32 %s259, 1
      %s261 = scalar_select %p258, %s259, %s260
      %p264 = pneg %p258
      %p265 = scmp.eq.s32.totalorder %s19, 1
      %p266 = por %p264, %p265
      %p267 = scmp.ne.s32.totalorder %s259, %s262
      %p268 = scmp.eq.s32.totalorder %s19, 0
      %p269 = por %p267, %p268
      %p270 = scmp.ne.s32.totalorder %s259, %s262
      %p271 = scmp.eq.s32.totalorder %s24, 1
      %p272 = por %p270, %p271
      %p273 = scmp.ne.s32.totalorder %s262, %s263
      %p274 = scmp.eq.s32.totalorder %s24, 0
      %p275 = por %p273, %p274
      %p276 = scmp.ne.s32.totalorder %s262, %s263
      %p277 = scmp.eq.s32.totalorder %s25, 1
      %p278 = por %p276, %p277
      %p280 = scmp.ne.s32.totalorder %s263, %s279
      %p281 = scmp.eq.s32.totalorder %s25, 0
      %p282 = por %p280, %p281
      %p283 = scmp.le.s32.totalorder 1, %s19
      %p284 = scmp.lt.s32.totalorder %s19, 3
      %p285 = pnand %p283, %p284
      %p286 = pneg %p285
      // Predicated region
      $region9: #{tpu_custom_call.1} parent=5 // pred_check
        _
      $region10: #{tpu_custom_call.1} parent=5 // pred_check_branch
        %288 = sbr.rel (%p285) target = $region12
      $region11: #{tpu_custom_call.1} parent=5 // pred_region
        %s289 = ssub.s32 %s19, 1
        // Predicated region
        $region13: #{tpu_custom_call.1} parent=11 // pred_check
          %p290 = pneg %p144
        $region14: #{tpu_custom_call.1} parent=11 // pred_check_branch
          %292 = sbr.rel (%p290) target = $region16
        $region15: #{tpu_custom_call.1} parent=11 // pred_region
          _
        $region16: #{tpu_custom_call.1} parent=11 // pred_fallthru
          _
        // Predicated region
        $region17: #{tpu_custom_call.1} parent=11 // pred_check
          %p293 = pneg %p165
        $region18: #{tpu_custom_call.1} parent=11 // pred_check_branch
          %295 = sbr.rel (%p293) target = $region20
        $region19: #{tpu_custom_call.1} parent=11 // pred_region
          _
        $region20: #{tpu_custom_call.1} parent=11 // pred_fallthru
          _
        // Predicated region
        $region21: #{tpu_custom_call.1} parent=11 // pred_check
          %p296 = pneg %p186
        $region22: #{tpu_custom_call.1} parent=11 // pred_check_branch
          %298 = sbr.rel (%p296) target = $region24
        $region23: #{tpu_custom_call.1} parent=11 // pred_region
          _
        $region24: #{tpu_custom_call.1} parent=11 // pred_fallthru
          _
        // Predicated region
        $region25: #{tpu_custom_call.1} parent=11 // pred_check
          %p299 = pneg %p207
        $region26: #{tpu_custom_call.1} parent=11 // pred_check_branch
          %301 = sbr.rel (%p299) target = $region28
        $region27: #{tpu_custom_call.1} parent=11 // pred_region
          _
        $region28: #{tpu_custom_call.1} parent=11 // pred_fallthru
          _
        // Predicated region
        $region29: #{tpu_custom_call.1} parent=11 // pred_check
          %p302 = pneg %p228
        $region30: #{tpu_custom_call.1} parent=11 // pred_check_branch
          %304 = sbr.rel (%p302) target = $region32
        $region31: #{tpu_custom_call.1} parent=11 // pred_region
          _
        $region32: #{tpu_custom_call.1} parent=11 // pred_fallthru
          _
        // Predicated region
        $region33: #{tpu_custom_call.1} parent=11 // pred_check
          %p305 = pneg %p249
        $region34: #{tpu_custom_call.1} parent=11 // pred_check_branch
          %307 = sbr.rel (%p305) target = $region36
        $region35: #{tpu_custom_call.1} parent=11 // pred_region
          _
        $region36: #{tpu_custom_call.1} parent=11 // pred_fallthru
          _
      $region12: #{tpu_custom_call.1} parent=5 // pred_fallthru
        _
      %p308 = scmp.lt.s32.totalorder %s19, 2
      // Predicated region
      $region37: #{tpu_custom_call.1} parent=5 // pred_check
        %p309 = pneg %p308
      $region38: #{tpu_custom_call.1} parent=5 // pred_check_branch
        %311 = sbr.rel (%p309) target = $region40
      $region39: #{tpu_custom_call.1} parent=5 // pred_region
        // Predicated region
        $region41: #{tpu_custom_call.1} parent=39 // pred_check
          %p312 = pneg %p39
        $region42: #{tpu_custom_call.1} parent=39 // pred_check_branch
          %314 = sbr.rel (%p312) target = $region44
        $region43: #{tpu_custom_call.1} parent=39 // pred_region
          %p315 = scmp.lt.s32.totalorder %s19, 1
          %s316 = scalar_select %p315, %s19, 1
          %s317 = smul.addr %s316, 8
          %s318 = scalar_lea.vmem %s0, %s317
        $region44: #{tpu_custom_call.1} parent=39 // pred_fallthru
          _
        // Predicated region
        $region45: #{tpu_custom_call.1} parent=39 // pred_check
          %p319 = pneg %p65
        $region46: #{tpu_custom_call.1} parent=39 // pred_check_branch
          %321 = sbr.rel (%p319) target = $region48
        $region47: #{tpu_custom_call.1} parent=39 // pred_region
          %p322 = scmp.lt.s32.totalorder %s19, 1
          %s323 = scalar_select %p322, %s19, 1
          %s324 = smul.addr %s323, 8
          %s325 = scalar_lea.vmem %s1, %s324
        $region48: #{tpu_custom_call.1} parent=39 // pred_fallthru
          _
        // Predicated region
        $region49: #{tpu_custom_call.1} parent=39 // pred_check
          %p326 = pneg %p91
        $region50: #{tpu_custom_call.1} parent=39 // pred_check_branch
          %328 = sbr.rel (%p326) target = $region52
        $region51: #{tpu_custom_call.1} parent=39 // pred_region
          %p329 = scmp.lt.s32.totalorder %s19, 1
          %s330 = scalar_select %p329, %s19, 1
          %s331 = smul.addr %s330, 8
          %s332 = scalar_lea.vmem %s2, %s331
        $region52: #{tpu_custom_call.1} parent=39 // pred_fallthru
          _
        // Predicated region
        $region53: #{tpu_custom_call.1} parent=39 // pred_check
          %p333 = pneg %p117
        $region54: #{tpu_custom_call.1} parent=39 // pred_check_branch
          %335 = sbr.rel (%p333) target = $region56
        $region55: #{tpu_custom_call.1} parent=39 // pred_region
          %p336 = scmp.lt.s32.totalorder %s19, 1
          %s337 = scalar_select %p336, %s19, 1
          %s338 = smul.addr %s337, 8
          %s339 = scalar_lea.vmem %s3, %s338
        $region56: #{tpu_custom_call.1} parent=39 // pred_fallthru
          _
      $region40: #{tpu_custom_call.1} parent=5 // pred_fallthru
        _
      %p340 = scmp.le.s32.totalorder 1, %s19
      %p341 = scmp.lt.s32.totalorder %s19, 3
      %p342 = pnand %p340, %p341
      %p343 = pneg %p342
      // Predicated region
      $region57: #{tpu_custom_call.1} parent=5 // pred_check
        _
      $region58: #{tpu_custom_call.1} parent=5 // pred_check_branch
        %345 = sbr.rel (%p342) target = $region60
      $region59: #{tpu_custom_call.1} parent=5 // pred_region
        %s346 = ssub.s32 %s19, 1
        %p347 = scmp.lt.s32.totalorder %s24, 1
        %s348 = scalar_select %p347, %s24, 1
        %s349 = smul.addr %s348, 8
        %s350 = scalar_lea.vmem %s0, %s349
        %p351 = pneg %p45
        %p352 = pneg %p42
        %p353 = scmp.lt.s32.totalorder %s24, 1
        %s354 = scalar_select %p353, %s24, 1
        %s355 = smul.addr %s354, 8
        %s356 = scalar_lea.vmem %s1, %s355
        %p357 = pneg %p71
        %p358 = pneg %p68
        %p359 = scmp.lt.s32.totalorder %s24, 1
        %s360 = scalar_select %p359, %s24, 1
        %s361 = smul.addr %s360, 8
        %s362 = scalar_lea.vmem %s2, %s361
        %p363 = pneg %p97
        %p364 = pneg %p94
        %p365 = scmp.lt.s32.totalorder %s24, 1
        %s366 = scalar_select %p365, %s24, 1
        %s367 = smul.addr %s366, 8
        %s368 = scalar_lea.vmem %s3, %s367
        %p369 = pneg %p123
        %p370 = pneg %p120
        %p371 = pneg %p144
        %p372 = pneg %p141
        %p373 = pneg %p165
        %p374 = pneg %p162
        %p375 = pneg %p186
        %p376 = pneg %p183
        %p377 = pneg %p207
        %p378 = pneg %p204
        %p379 = pneg %p228
        %p380 = pneg %p225
        %p381 = pneg %p249
        %p382 = pneg %p246
        %p383 = pneg %p275
        %p384 = pneg %p272
        %s385 = sand.u32 %s262, 1
        %s386 = scalar_lea.sflag [#allocation3], %s385
        %s387 = sand.u32 %s262, 1
        %s388 = smul.addr %s387, 8
        %s389 = scalar_lea.vmem [#allocation2], %s388
        %p390 = scmp.lt.s32.totalorder %s24, 1
        %s391 = scalar_select %p390, %s24, 1
        %s392 = smul.addr %s391, 8
        %s393 = scalar_lea.vmem %s0, %s392
        %p394 = scmp.lt.s32.totalorder %s24, 1
        %s395 = scalar_select %p394, %s24, 1
        %s396 = smul.addr %s395, 8
        %s397 = scalar_lea.vmem %s1, %s396
        %p398 = scmp.lt.s32.totalorder %s24, 1
        %s399 = scalar_select %p398, %s24, 1
        %s400 = smul.addr %s399, 8
        %s401 = scalar_lea.vmem %s2, %s400
        %p402 = scmp.lt.s32.totalorder %s24, 1
        %s403 = scalar_select %p402, %s24, 1
        %s404 = smul.addr %s403, 8
        %s405 = scalar_lea.vmem %s3, %s404
        %v406 = vld [vmem:[%s393] sm:$0xff]
        %v407 = vld [vmem:[%s397] sm:$0xff]
        %v408 = vld [vmem:[%s401] sm:$0xff]
        %v409 = vld [vmem:[%s4] sm:$0xff]
        %v410 = vld [vmem:[%s4 + $0x8] sm:$0xff]
        %v411 = vld [vmem:[%s4 + $0x10] sm:$0xff]
        %v412 = vld [vmem:[%s4 + $0x18] sm:$0xff]
        %v413 = vld [vmem:[%s5] sm:$0x1]
        %v415 = vlaneseq
        %v416 = vshrl.u32 %v415, 7
        %v417 = vsub.s32 0, %v416
        %v418 = vrot.slane %v413, %v417
        %vm420 = vcmask 261120
        %v422 = vsel %vm420, %v406, 0
        %424 = vmatprep.subr.mxu0 0.0
        %425 = vmatpush1.msra.mxu0 %v409
        %426 = vmatprep.subr.mxu0 0.0
        %427 = vmatpush1.msra.mxu0 %v410
        %428 = vmatprep.subr.mxu0 0.0
        %429 = vmatpush1.msra.mxu0 %v411
        %430 = vmatprep.subr.mxu0 0.0
        %431 = vmatpush1.msra.mxu0 %v412
        %432 = vmatprep.subr.mxu0 0.0
        %433 = vmatpush1.msra.mxu0 0.0
        %434 = vmatprep.subr.mxu0 0.0
        %435 = vmatpush1.msra.mxu0 0.0
        %436 = vmatprep.subr.mxu0 0.0
        %437 = vmatpush1.msra.mxu0 0.0
        %438 = vmatprep.subr.mxu0 0.0
        %439 = vmatpush1.msra.mxu0 0.0
        %440 = vmatprep.subr.mxu0 0.0
        %441 = vmatpush1.msra.mxu0 0.0
        %442 = vmatprep.subr.mxu0 0.0
        %443 = vmatpush1.msra.mxu0 0.0
        %444 = vmatprep.subr.mxu0 0.0
        %445 = vmatpush1.msra.mxu0 0.0
        %446 = vmatprep.subr.mxu0 0.0
        %447 = vmatpush1.msra.mxu0 0.0
        %448 = vmatprep.subr.mxu0 0.0
        %449 = vmatpush1.msra.mxu0 0.0
        %450 = vmatprep.subr.mxu0 0.0
        %451 = vmatpush1.msra.mxu0 0.0
        %452 = vmatprep.subr.mxu0 0.0
        %453 = vmatpush1.msra.mxu0 0.0
        %454 = vmatprep.subr.mxu0 0.0
        %455 = vmatpush1.msra.mxu0 0.0
        %456 = vmatprep.subr.mxu0 0.0
        %457 = vmatpush1.msra.mxu0 0.0
        %458 = vmatprep.subr.mxu0 0.0
        %459 = vmatpush1.msra.mxu0 0.0
        %460 = vmatprep.subr.mxu0 0.0
        %461 = vmatpush1.msra.mxu0 0.0
        %462 = vmatprep.subr.mxu0 0.0
        %463 = vmatpush1.msra.mxu0 0.0
        %464 = vmatprep.subr.mxu0 0.0
        %465 = vmatpush1.msra.mxu0 0.0
        %466 = vmatprep.subr.mxu0 0.0
        %467 = vmatpush1.msra.mxu0 0.0
        %468 = vmatprep.subr.mxu0 0.0
        %469 = vmatpush1.msra.mxu0 0.0
        %470 = vmatprep.subr.mxu0 0.0
        %471 = vmatpush1.msra.mxu0 0.0
        %472 = vmatprep.subr.mxu0 0.0
        %473 = vmatpush1.msra.mxu0 0.0
        %474 = vmatprep.subr.mxu0 0.0
        %475 = vmatpush1.msra.mxu0 0.0
        %476 = vmatprep.subr.mxu0 0.0
        %477 = vmatpush1.msra.mxu0 0.0
        %478 = vmatprep.subr.mxu0 0.0
        %479 = vmatpush1.msra.mxu0 0.0
        %480 = vmatprep.subr.mxu0 0.0
        %481 = vmatpush1.msra.mxu0 0.0
        %482 = vmatprep.subr.mxu0 0.0
        %483 = vmatpush1.msra.mxu0 0.0
        %484 = vmatprep.subr.mxu0 0.0
        %485 = vmatpush1.msra.mxu0 0.0
        %486 = vmatprep.subr.mxu0 0.0
        %487 = vmatpush1.msra.mxu0 0.0
        %488 = vmatprep.mubr.f32.mxu0 0.0
        %489 = vmatmul.mubr.f32.gmra.mrb[0].mxu0 %v422
        %v490 = vpop.f32.mrb[0].mxu0
        %v491 = vadd.f32 %v418, %v490
        %v492 = vpop.f32.mrb[0].mxu0
        %493 = vdwg.mxu0
        %v494 = vld [vmem:[%s6] sm:$0xff]
        %v495 = vld [vmem:[%s6 + $0x8] sm:$0xff]
        %v496 = vld [vmem:[%s6 + $0x10] sm:$0xff]
        %v497 = vld [vmem:[%s6 + $0x18] sm:$0xff]
        %v498 = vld [vmem:[%s7] sm:$0x1]
        %v500 = vlaneseq
        %v501 = vshrl.u32 %v500, 7
        %v502 = vsub.s32 0, %v501
        %v503 = vrot.slane %v498, %v502
        %v506 = vsel %vm420, %v407, 0
        %508 = vmatprep.subr.mxu0 0.0
        %509 = vmatpush1.msra.mxu0 %v494
        %510 = vmatprep.subr.mxu0 0.0
        %511 = vmatpush1.msra.mxu0 %v495
        %512 = vmatprep.subr.mxu0 0.0
        %513 = vmatpush1.msra.mxu0 %v496
        %514 = vmatprep.subr.mxu0 0.0
        %515 = vmatpush1.msra.mxu0 %v497
        %516 = vmatprep.subr.mxu0 0.0
        %517 = vmatpush1.msra.mxu0 0.0
        %518 = vmatprep.subr.mxu0 0.0
        %519 = vmatpush1.msra.mxu0 0.0
        %520 = vmatprep.subr.mxu0 0.0
        %521 = vmatpush1.msra.mxu0 0.0
        %522 = vmatprep.subr.mxu0 0.0
        %523 = vmatpush1.msra.mxu0 0.0
        %524 = vmatprep.subr.mxu0 0.0
        %525 = vmatpush1.msra.mxu0 0.0
        %526 = vmatprep.subr.mxu0 0.0
        %527 = vmatpush1.msra.mxu0 0.0
        %528 = vmatprep.subr.mxu0 0.0
        %529 = vmatpush1.msra.mxu0 0.0
        %530 = vmatprep.subr.mxu0 0.0
        %531 = vmatpush1.msra.mxu0 0.0
        %532 = vmatprep.subr.mxu0 0.0
        %533 = vmatpush1.msra.mxu0 0.0
        %534 = vmatprep.subr.mxu0 0.0
        %535 = vmatpush1.msra.mxu0 0.0
        %536 = vmatprep.subr.mxu0 0.0
        %537 = vmatpush1.msra.mxu0 0.0
        %538 = vmatprep.subr.mxu0 0.0
        %539 = vmatpush1.msra.mxu0 0.0
        %540 = vmatprep.subr.mxu0 0.0
        %541 = vmatpush1.msra.mxu0 0.0
        %542 = vmatprep.subr.mxu0 0.0
        %543 = vmatpush1.msra.mxu0 0.0
        %544 = vmatprep.subr.mxu0 0.0
        %545 = vmatpush1.msra.mxu0 0.0
        %546 = vmatprep.subr.mxu0 0.0
        %547 = vmatpush1.msra.mxu0 0.0
        %548 = vmatprep.subr.mxu0 0.0
        %549 = vmatpush1.msra.mxu0 0.0
        %550 = vmatprep.subr.mxu0 0.0
        %551 = vmatpush1.msra.mxu0 0.0
        %552 = vmatprep.subr.mxu0 0.0
        %553 = vmatpush1.msra.mxu0 0.0
        %554 = vmatprep.subr.mxu0 0.0
        %555 = vmatpush1.msra.mxu0 0.0
        %556 = vmatprep.subr.mxu0 0.0
        %557 = vmatpush1.msra.mxu0 0.0
        %558 = vmatprep.subr.mxu0 0.0
        %559 = vmatpush1.msra.mxu0 0.0
        %560 = vmatprep.subr.mxu0 0.0
        %561 = vmatpush1.msra.mxu0 0.0
        %562 = vmatprep.subr.mxu0 0.0
        %563 = vmatpush1.msra.mxu0 0.0
        %564 = vmatprep.subr.mxu0 0.0
        %565 = vmatpush1.msra.mxu0 0.0
        %566 = vmatprep.subr.mxu0 0.0
        %567 = vmatpush1.msra.mxu0 0.0
        %568 = vmatprep.subr.mxu0 0.0
        %569 = vmatpush1.msra.mxu0 0.0
        %570 = vmatprep.subr.mxu0 0.0
        %571 = vmatpush1.msra.mxu0 0.0
        %572 = vmatprep.mubr.f32.mxu0 0.0
        %573 = vmatmul.mubr.f32.gmra.mrb[0].mxu0 %v506
        %v574 = vpop.f32.mrb[0].mxu0
        %v575 = vadd.f32 %v503, %v574
        %v576 = vpop.f32.mrb[0].mxu0
        %577 = vdwg.mxu0
        %v578 = vld [vmem:[%s8] sm:$0xff]
        %v579 = vld [vmem:[%s8 + $0x8] sm:$0xff]
        %v580 = vld [vmem:[%s8 + $0x10] sm:$0xff]
        %v581 = vld [vmem:[%s8 + $0x18] sm:$0xff]
        %v582 = vld [vmem:[%s9] sm:$0x1]
        %v584 = vlaneseq
        %v585 = vshrl.u32 %v584, 7
        %v586 = vsub.s32 0, %v585
        %v587 = vrot.slane %v582, %v586
        %v590 = vsel %vm420, %v408, 0
        %592 = vmatprep.subr.mxu0 0.0
        %593 = vmatpush1.msra.mxu0 %v578
        %594 = vmatprep.subr.mxu0 0.0
        %595 = vmatpush1.msra.mxu0 %v579
        %596 = vmatprep.subr.mxu0 0.0
        %597 = vmatpush1.msra.mxu0 %v580
        %598 = vmatprep.subr.mxu0 0.0
        %599 = vmatpush1.msra.mxu0 %v581
        %600 = vmatprep.subr.mxu0 0.0
        %601 = vmatpush1.msra.mxu0 0.0
        %602 = vmatprep.subr.mxu0 0.0
        %603 = vmatpush1.msra.mxu0 0.0
        %604 = vmatprep.subr.mxu0 0.0
        %605 = vmatpush1.msra.mxu0 0.0
        %606 = vmatprep.subr.mxu0 0.0
        %607 = vmatpush1.msra.mxu0 0.0
        %608 = vmatprep.subr.mxu0 0.0
        %609 = vmatpush1.msra.mxu0 0.0
        %610 = vmatprep.subr.mxu0 0.0
        %611 = vmatpush1.msra.mxu0 0.0
        %612 = vmatprep.subr.mxu0 0.0
        %613 = vmatpush1.msra.mxu0 0.0
        %614 = vmatprep.subr.mxu0 0.0
        %615 = vmatpush1.msra.mxu0 0.0
        %616 = vmatprep.subr.mxu0 0.0
        %617 = vmatpush1.msra.mxu0 0.0
        %618 = vmatprep.subr.mxu0 0.0
        %619 = vmatpush1.msra.mxu0 0.0
        %620 = vmatprep.subr.mxu0 0.0
        %621 = vmatpush1.msra.mxu0 0.0
        %622 = vmatprep.subr.mxu0 0.0
        %623 = vmatpush1.msra.mxu0 0.0
        %624 = vmatprep.subr.mxu0 0.0
        %625 = vmatpush1.msra.mxu0 0.0
        %626 = vmatprep.subr.mxu0 0.0
        %627 = vmatpush1.msra.mxu0 0.0
        %628 = vmatprep.subr.mxu0 0.0
        %629 = vmatpush1.msra.mxu0 0.0
        %630 = vmatprep.subr.mxu0 0.0
        %631 = vmatpush1.msra.mxu0 0.0
        %632 = vmatprep.subr.mxu0 0.0
        %633 = vmatpush1.msra.mxu0 0.0
        %634 = vmatprep.subr.mxu0 0.0
        %635 = vmatpush1.msra.mxu0 0.0
        %636 = vmatprep.subr.mxu0 0.0
        %637 = vmatpush1.msra.mxu0 0.0
        %638 = vmatprep.subr.mxu0 0.0
        %639 = vmatpush1.msra.mxu0 0.0
        %640 = vmatprep.subr.mxu0 0.0
        %641 = vmatpush1.msra.mxu0 0.0
        %642 = vmatprep.subr.mxu0 0.0
        %643 = vmatpush1.msra.mxu0 0.0
        %644 = vmatprep.subr.mxu0 0.0
        %645 = vmatpush1.msra.mxu0 0.0
        %646 = vmatprep.subr.mxu0 0.0
        %647 = vmatpush1.msra.mxu0 0.0
        %648 = vmatprep.subr.mxu0 0.0
        %649 = vmatpush1.msra.mxu0 0.0
        %650 = vmatprep.subr.mxu0 0.0
        %651 = vmatpush1.msra.mxu0 0.0
        %652 = vmatprep.subr.mxu0 0.0
        %653 = vmatpush1.msra.mxu0 0.0
        %654 = vmatprep.subr.mxu0 0.0
        %655 = vmatpush1.msra.mxu0 0.0
        %656 = vmatprep.mubr.f32.mxu0 0.0
        %657 = vmatmul.mubr.f32.gmra.mrb[0].mxu0 %v590
        %v658 = vpop.f32.mrb[0].mxu0
        %v659 = vadd.f32 %v587, %v658
        %v660 = vpop.f32.mrb[0].mxu0
        %661 = vdwg.mxu0
        %vm662 = vcmask 130048
        %v664 = vsel %vm662, %v491, 0
        %v667 = vsel %vm662, %v575, 0
        %669 = vmatprep.subr.mxu0 0.0
        %670 = vmatpush1.xpose.msra.mxu0 %v667
        %671 = vmatprep.subr.mxu0 0.0
        %672 = vmatpush1.xpose.msra.mxu0 0.0
        %673 = vmatprep.subr.mxu0 0.0
        %674 = vmatpush1.xpose.msra.mxu0 0.0
        %675 = vmatprep.subr.mxu0 0.0
        %676 = vmatpush1.xpose.msra.mxu0 0.0
        %677 = vmatprep.subr.mxu0 0.0
        %678 = vmatpush1.xpose.msra.mxu0 0.0
        %679 = vmatprep.subr.mxu0 0.0
        %680 = vmatpush1.xpose.msra.mxu0 0.0
        %681 = vmatprep.subr.mxu0 0.0
        %682 = vmatpush1.xpose.msra.mxu0 0.0
        %683 = vmatprep.subr.mxu0 0.0
        %684 = vmatpush1.xpose.msra.mxu0 0.0
        %685 = vmatprep.subr.mxu0 0.0
        %686 = vmatpush1.xpose.msra.mxu0 0.0
        %687 = vmatprep.subr.mxu0 0.0
        %688 = vmatpush1.xpose.msra.mxu0 0.0
        %689 = vmatprep.subr.mxu0 0.0
        %690 = vmatpush1.xpose.msra.mxu0 0.0
        %691 = vmatprep.subr.mxu0 0.0
        %692 = vmatpush1.xpose.msra.mxu0 0.0
        %693 = vmatprep.subr.mxu0 0.0
        %694 = vmatpush1.xpose.msra.mxu0 0.0
        %695 = vmatprep.subr.mxu0 0.0
        %696 = vmatpush1.xpose.msra.mxu0 0.0
        %697 = vmatprep.subr.mxu0 0.0
        %698 = vmatpush1.xpose.msra.mxu0 0.0
        %699 = vmatprep.subr.mxu0 0.0
        %700 = vmatpush1.xpose.msra.mxu0 0.0
        %701 = vmatprep.subr.mxu0 0.0
        %702 = vmatpush1.xpose.msra.mxu0 0.0
        %703 = vmatprep.subr.mxu0 0.0
        %704 = vmatpush1.xpose.msra.mxu0 0.0
        %705 = vmatprep.subr.mxu0 0.0
        %706 = vmatpush1.xpose.msra.mxu0 0.0
        %707 = vmatprep.subr.mxu0 0.0
        %708 = vmatpush1.xpose.msra.mxu0 0.0
        %709 = vmatprep.subr.mxu0 0.0
        %710 = vmatpush1.xpose.msra.mxu0 0.0
        %711 = vmatprep.subr.mxu0 0.0
        %712 = vmatpush1.xpose.msra.mxu0 0.0
        %713 = vmatprep.subr.mxu0 0.0
        %714 = vmatpush1.xpose.msra.mxu0 0.0
        %715 = vmatprep.subr.mxu0 0.0
        %716 = vmatpush1.xpose.msra.mxu0 0.0
        %717 = vmatprep.subr.mxu0 0.0
        %718 = vmatpush1.xpose.msra.mxu0 0.0
        %719 = vmatprep.subr.mxu0 0.0
        %720 = vmatpush1.xpose.msra.mxu0 0.0
        %721 = vmatprep.subr.mxu0 0.0
        %722 = vmatpush1.xpose.msra.mxu0 0.0
        %723 = vmatprep.subr.mxu0 0.0
        %724 = vmatpush1.xpose.msra.mxu0 0.0
        %725 = vmatprep.subr.mxu0 0.0
        %726 = vmatpush1.xpose.msra.mxu0 0.0
        %727 = vmatprep.subr.mxu0 0.0
        %728 = vmatpush1.xpose.msra.mxu0 0.0
        %729 = vmatprep.subr.mxu0 0.0
        %730 = vmatpush1.xpose.msra.mxu0 0.0
        %731 = vmatprep.subr.mxu0 0.0
        %732 = vmatpush1.xpose.msra.mxu0 0.0
        %733 = vmatprep.mubr.f32.mxu0 0.0
        %734 = vmatmul.mubr.f32.gmra.mrb[0].mxu0 %v664
        %v735 = vpop.f32.mrb[0].mxu0
        %v736 = vadd.f32 0.0, %v735
        %v737 = vpop.f32.mrb[0].mxu0
        %738 = vdwg.mxu0
        %v739 = vld [vmem:[%s405] sm:$0xff]
        %vm740 = vcmp.eq.s32.totalorder %v739, 0
        %v741 = vsel %vm740, -1e+09, %v736
        %v742 = vmul.f32 %v741, 0.25
        %vm743 = vcmask 64512
        %v744 = vsel %vm743, %v742, -inf
        %745 = vmax.xlane.f32.xlu0 %v744
        %v746 = vpop.xlane.xlu0 %745
        %v747 = vsub.f32 %v742, %v746
        %v748 = vmul.f32 %v747, 1.442695
        %v749 = vpow.pop %v748
        %v750 = vsel %vm743, %v749, 0.0
        %751 = vadd.xlane.f32.xlu0 %v750
        %v752 = vpop.xlane.xlu0 %751
        %v753 = vrcp.pop %v752
        %v754 = vmul.f32 %v749, %v753
        %v756 = vsel %vm743, %v754, 0
        %758 = vmatprep.subr.mxu0 0.0
        %759 = vmatpush1.msra.mxu0 %v659
        %760 = vmatprep.subr.mxu0 0.0
        %761 = vmatpush1.msra.mxu0 0.0
        %762 = vmatprep.subr.mxu0 0.0
        %763 = vmatpush1.msra.mxu0 0.0
        %764 = vmatprep.subr.mxu0 0.0
        %765 = vmatpush1.msra.mxu0 0.0
        %766 = vmatprep.subr.mxu0 0.0
        %767 = vmatpush1.msra.mxu0 0.0
        %768 = vmatprep.subr.mxu0 0.0
        %769 = vmatpush1.msra.mxu0 0.0
        %770 = vmatprep.subr.mxu0 0.0
        %771 = vmatpush1.msra.mxu0 0.0
        %772 = vmatprep.subr.mxu0 0.0
        %773 = vmatpush1.msra.mxu0 0.0
        %774 = vmatprep.subr.mxu0 0.0
        %775 = vmatpush1.msra.mxu0 0.0
        %776 = vmatprep.subr.mxu0 0.0
        %777 = vmatpush1.msra.mxu0 0.0
        %778 = vmatprep.subr.mxu0 0.0
        %779 = vmatpush1.msra.mxu0 0.0
        %780 = vmatprep.subr.mxu0 0.0
        %781 = vmatpush1.msra.mxu0 0.0
        %782 = vmatprep.subr.mxu0 0.0
        %783 = vmatpush1.msra.mxu0 0.0
        %784 = vmatprep.subr.mxu0 0.0
        %785 = vmatpush1.msra.mxu0 0.0
        %786 = vmatprep.subr.mxu0 0.0
        %787 = vmatpush1.msra.mxu0 0.0
        %788 = vmatprep.subr.mxu0 0.0
        %789 = vmatpush1.msra.mxu0 0.0
        %790 = vmatprep.subr.mxu0 0.0
        %791 = vmatpush1.msra.mxu0 0.0
        %792 = vmatprep.subr.mxu0 0.0
        %793 = vmatpush1.msra.mxu0 0.0
        %794 = vmatprep.subr.mxu0 0.0
        %795 = vmatpush1.msra.mxu0 0.0
        %796 = vmatprep.subr.mxu0 0.0
        %797 = vmatpush1.msra.mxu0 0.0
        %798 = vmatprep.subr.mxu0 0.0
        %799 = vmatpush1.msra.mxu0 0.0
        %800 = vmatprep.subr.mxu0 0.0
        %801 = vmatpush1.msra.mxu0 0.0
        %802 = vmatprep.subr.mxu0 0.0
        %803 = vmatpush1.msra.mxu0 0.0
        %804 = vmatprep.subr.mxu0 0.0
        %805 = vmatpush1.msra.mxu0 0.0
        %806 = vmatprep.subr.mxu0 0.0
        %807 = vmatpush1.msra.mxu0 0.0
        %808 = vmatprep.subr.mxu0 0.0
        %809 = vmatpush1.msra.mxu0 0.0
        %810 = vmatprep.subr.mxu0 0.0
        %811 = vmatpush1.msra.mxu0 0.0
        %812 = vmatprep.subr.mxu0 0.0
        %813 = vmatpush1.msra.mxu0 0.0
        %814 = vmatprep.subr.mxu0 0.0
        %815 = vmatpush1.msra.mxu0 0.0
        %816 = vmatprep.subr.mxu0 0.0
        %817 = vmatpush1.msra.mxu0 0.0
        %818 = vmatprep.subr.mxu0 0.0
        %819 = vmatpush1.msra.mxu0 0.0
        %820 = vmatprep.subr.mxu0 0.0
        %821 = vmatpush1.msra.mxu0 0.0
        %822 = vmatprep.mubr.f32.mxu0 0.0
        %823 = vmatmul.mubr.f32.gmra.mrb[0].mxu0 %v756
        %v824 = vpop.f32.mrb[0].mxu0
        %v825 = vadd.f32 0.0, %v824
        %v826 = vpop.f32.mrb[0].mxu0
        %827 = vdwg.mxu0
        %828 = vst.msk [vmem:[%s389] sm:$0xff] %vm662, %v825
        %s829 = sand.u32 %s262, 1
        %s830 = scalar_lea.sflag [#allocation3], %s829
        %s831 = sand.u32 %s262, 1
        %s832 = smul.addr %s831, 8
        %s833 = scalar_lea.vmem [#allocation2], %s832
        // Predicated region
        $region61: #{tpu_custom_call.1} parent=59 // pred_check
          %p834 = pneg %p272
        $region62: #{tpu_custom_call.1} parent=59 // pred_check_branch
          %836 = sbr.rel (%p834) target = $region64
        $region63: #{tpu_custom_call.1} parent=59 // pred_region
          %s838 = ssub.s32 128, 128
          %839 = vsyncadd %s830, %s838
          %s840 = smul.addr %s24, 128
          %s841 = scalar_lea.hbm %s10, %s840
          %s843 = sshll.u32 %s833, 4
          %s844 = int_to_ptr.vmem [resolvable:$true] %s843
          %846 = dma.vmem_to_hbm [thread:$0]  %s844, 128, %s841, %s830
        $region64: #{tpu_custom_call.1} parent=59 // pred_fallthru
          _
      $region60: #{tpu_custom_call.1} parent=5 // pred_fallthru
        _
      %p847 = scmp.le.s32.totalorder 2, %s19
      // Predicated region
      $region65: #{tpu_custom_call.1} parent=5 // pred_check
        %p848 = pneg %p847
      $region66: #{tpu_custom_call.1} parent=5 // pred_check_branch
        %850 = sbr.rel (%p848) target = $region68
      $region67: #{tpu_custom_call.1} parent=5 // pred_region
        %s851 = ssub.s32 %s19, 2
        // Predicated region
        $region69: #{tpu_custom_call.1} parent=67 // pred_check
          %p852 = pneg %p278
        $region70: #{tpu_custom_call.1} parent=67 // pred_check_branch
          %854 = sbr.rel (%p852) target = $region72
        $region71: #{tpu_custom_call.1} parent=67 // pred_region
          %s855 = sand.u32 %s263, 1
          %s856 = scalar_lea.sflag [#allocation3], %s855
          %s857 = sand.u32 %s263, 1
          %s858 = smul.addr %s857, 8
          %s859 = scalar_lea.vmem [#allocation2], %s858
          %860 = dma.done %s856, 128
        $region72: #{tpu_custom_call.1} parent=67 // pred_fallthru
          _
      $region68: #{tpu_custom_call.1} parent=5 // pred_fallthru
        _
    $region6: #{tpu_custom_call.1} parent=1 // loop_footer
      %s23 = sadd.s32 1, %s19
    $region7: #{tpu_custom_call.1} parent=1 // loop_footer_branch
      %18 = sbr.rel target = $region3
    $region8: #{tpu_custom_call.1} parent=1 // loop_exit
      _
    %861 = vsyncpa [#allocation3], 1
    %s862 = scalar_lea.sflag [#allocation3], 1
    %863 = vsyncpa %s862, 1

</llo_original>
